<compile_context>
chip_gen: v5e
topology: v5e:2x2
jax: 0.10.0
libtpu: 0.0.40
codegen_flags: <defaults>
</compile_context>

<pallas_src>
import jax
import jax.numpy as jnp
from jax.experimental import pallas as pl
from jax.experimental.pallas import tpu as pltpu


def _round_up(x, m):
    return ((x + m - 1) // m) * m


def _cdiv(a, b):
    return -(-a // b)


def _vmem_budgets():
    """(row-tile selection budget, scoped-vmem limit cap) in bytes, chip-aware."""
    cap = 64 << 20
    try:
        cap = int(getattr(pltpu.get_tpu_info(), "vmem_capacity_bytes", cap))
    except Exception:
        pass
    if cap >= (96 << 20):            # 128 MiB parts (v5e / v6e)
        return 96 << 20, 112 << 20
    return 40 << 20, 48 << 20        # v7x: 64 MiB per TensorCore, leave headroom


def _choose_tm(n_rows, in_ft, out_ft, out_ft_p, x_itemsize, budget_bytes):
    """Largest power-of-two row tile that fits the VMEM budget, clamped so the
    row grid keeps >= 2 steps (v7x dual-TC) whenever there is enough work."""
    # Resident for the whole kernel: bf16 weights + (1, X) f32 biases
    # (sublane-padded to 8 rows in VMEM).
    weight_bytes = (in_ft * 2 * out_ft_p + 2 * out_ft_p * out_ft_p) * 2
    weight_bytes += 4 * 8 * out_ft_p * 4
    # Per-row streamed / temporary bytes: double-buffered x and out tiles plus
    # ~8 f32 temporaries of width out_ft_p (fused result, h, sc, prelu temps).
    per_row = 2 * (in_ft * x_itemsize + out_ft * 4) + 8 * out_ft_p * 4
    tm = 8
    for c in (2048, 1024, 512, 256, 128, 64, 32, 16, 8):
        if weight_bytes + c * per_row <= budget_bytes:
            tm = c
            break
    row_cap = _round_up(max(_cdiv(n_rows, 2), 1), 8) if n_rows > 8 else 8
    return max(8, min(tm, row_cap))


def proj_head_kernel(alpha_ref,          # SMEM (3,): PReLU slopes
                     x_ref,              # (tm, in_ft) input tile (f32 or bf16)
                     wa_ref, ba_ref,     # (in_ft, 2*out_ft_p) bf16, (1, 2*out_ft_p) f32
                     w2_ref, b2_ref,     # (out_ft_p, out_ft_p) bf16, (1, out_ft_p) f32
                     w3_ref, b3_ref,     # (out_ft_p, out_ft_p) bf16, (1, out_ft_p) f32
                     o_ref):             # (tm, out_ft)
    # Hoist scalar reads once per tile.
    a1 = alpha_ref[0]
    a2 = alpha_ref[1]
    a3 = alpha_ref[2]
    out_ft = o_ref.shape[-1]
    out_ft_p = w2_ref.shape[-1]

    def prelu(v, a):
        return jnp.where(v >= 0.0, v, a * v)

    # bf16 operands into the MXU (no-op cast if x is already bf16), f32 accum.
    xb = x_ref[...].astype(wa_ref.dtype)

    # Fused first-layer + shortcut matmul: x @ [w1 | w_sc].
    y = jnp.dot(xb, wa_ref[...], preferred_element_type=jnp.float32) + ba_ref[...]
    h = y[:, :out_ft_p]      # ffn branch, layer 1 (lane-aligned split)
    sc = y[:, out_ft_p:]     # shortcut branch

    h = prelu(h, a1)
    h = jnp.dot(h.astype(w2_ref.dtype), w2_ref[...],
                preferred_element_type=jnp.float32) + b2_ref[...]
    h = prelu(h, a2)
    h = jnp.dot(h.astype(w3_ref.dtype), w3_ref[...],
                preferred_element_type=jnp.float32) + b3_ref[...]
    h = prelu(h, a3)

    res = h + sc
    if out_ft != out_ft_p:          # static (trace-time) branch
        res = res[:, :out_ft]
    o_ref[...] = res.astype(o_ref.dtype)


def proj_head(x, params, *, tm=None, feature_align=128):
    """x: (N, in_ft). params: weights stored as (fan_in, fan_out) = torch W.T."""
    N, in_ft = x.shape
    out_ft = params["w1"].shape[1]
    out_ft_p = _round_up(out_ft, feature_align)

    def padc(w):
        return jnp.pad(w, ((0, 0), (0, out_ft_p - w.shape[1])))

    # Fuse (w1 | w_sc) / (b1 | b_sc); zero-pad only the OUTPUT columns so the
    # in-kernel split and the L2/L3 contraction dims are 128-aligned.  The K
    # dim stays at in_ft so x needs no feature padding.
    wa = jnp.concatenate([padc(params["w1"]), padc(params["w_sc"])],
                         axis=1).astype(jnp.bfloat16)
    ba = jnp.concatenate([padc(params["b1"]), padc(params["b_sc"])],
                         axis=1).astype(jnp.float32)
    w2 = jnp.pad(params["w2"], ((0, out_ft_p - out_ft), (0, out_ft_p - out_ft))
                 ).astype(jnp.bfloat16)
    b2 = padc(params["b2"]).astype(jnp.float32)
    w3 = jnp.pad(params["w3"], ((0, out_ft_p - out_ft), (0, out_ft_p - out_ft))
                 ).astype(jnp.bfloat16)
    b3 = padc(params["b3"]).astype(jnp.float32)
    alpha = params["alpha"].astype(jnp.float32)

    tm_budget, limit_cap = _vmem_budgets()
    if tm is None:
        tm = _choose_tm(N, in_ft, out_ft, out_ft_p, x.dtype.itemsize, tm_budget)
    grid = _cdiv(N, tm)   # un-padded row count; Pallas masks the partial last block

    # Scoped-VMEM limit: single-buffered residents + double-buffered streamed
    # I/O + f32 temporaries + headroom, capped per chip (48 MiB on v7x).
    weight_bytes = (wa.size + w2.size + w3.size) * 2 \
        + (ba.size + b2.size + b3.size) * 4 * 8          # (1,X) biases sublane-pad to 8
    io_bytes = 2 * tm * (in_ft * x.dtype.itemsize + out_ft * 4)
    tmp_bytes = 8 * tm * out_ft_p * 4
    est = weight_bytes + io_bytes + tmp_bytes + (8 << 20)
    vmem_limit = int(min(max(est, 32 << 20), limit_cap))

    vmem_resident = pl.BlockSpec(memory_space=pltpu.MemorySpace.VMEM)

    out = pl.pallas_call(
        proj_head_kernel,
        out_shape=jax.ShapeDtypeStruct((N, out_ft), x.dtype),
        grid_spec=pl.GridSpec(
            grid=(grid,),
            in_specs=[
                pl.BlockSpec(memory_space=pltpu.MemorySpace.SMEM),   # alpha (3,)
                pl.BlockSpec((tm, in_ft), lambda i: (i, 0)),         # x tile (unpadded)
                vmem_resident, vmem_resident,                        # wa, ba
                vmem_resident, vmem_resident,                        # w2, b2
                vmem_resident, vmem_resident,                        # w3, b3
            ],
            out_specs=pl.BlockSpec((tm, out_ft), lambda i: (i, 0)),
        ),
        compiler_params=pltpu.CompilerParams(
            dimension_semantics=("parallel",),
            vmem_limit_bytes=vmem_limit,
        ),
    )(alpha, x, wa, ba, w2, b2, w3, b3)

    return out


def _reference(x, p):
    """Reference matching the kernel's numerics: bf16-rounded matmul operands
    (both activations and weights), f32 accumulation and biases."""
    def prelu(v, a):
        return jnp.where(v >= 0.0, v, a * v)

    def mm(a, w):
        return jnp.dot(a.astype(jnp.bfloat16), w.astype(jnp.bfloat16),
                       preferred_element_type=jnp.float32)

    h = prelu(mm(x, p["w1"]) + p["b1"], p["alpha"][0])
    h = prelu(mm(h, p["w2"]) + p["b2"], p["alpha"][1])
    h = prelu(mm(h, p["w3"]) + p["b3"], p["alpha"][2])
    return h + mm(x, p["w_sc"]) + p["b_sc"]


def init_params(key, in_ft, out_ft):
    ks = jax.random.split(key, 8)
    s_in = 1.0 / jnp.sqrt(in_ft)
    s_out = 1.0 / jnp.sqrt(out_ft)
    u = jax.random.uniform
    return {
        # weights stored as (fan_in, fan_out) = PyTorch weight.T
        "w1":   u(ks[0], (in_ft, out_ft), jnp.float32, -s_in, s_in),
        "b1":   u(ks[1], (1, out_ft), jnp.float32, -s_in, s_in),
        "w2":   u(ks[2], (out_ft, out_ft), jnp.float32, -s_out, s_out),
        "b2":   u(ks[3], (1, out_ft), jnp.float32, -s_out, s_out),
        "w3":   u(ks[4], (out_ft, out_ft), jnp.float32, -s_out, s_out),
        "b3":   u(ks[5], (1, out_ft), jnp.float32, -s_out, s_out),
        "w_sc": u(ks[6], (in_ft, out_ft), jnp.float32, -s_in, s_in),
        "b_sc": u(ks[7], (1, out_ft), jnp.float32, -s_in, s_in),
        # PReLU init = 0.25 (torch default), one slope per PReLU module
        "alpha": jnp.full((3,), 0.25, jnp.float32),
    }


if __name__ == "__main__":
    key = jax.random.PRNGKey(0)
    k_x, k_p, k_x2, k_p2 = jax.random.split(key, 4)

    # Test 1: small shape, single tile.
    N, in_ft, out_ft = 8, 32, 32
    x = jax.random.normal(k_x, (N, in_ft), jnp.float32)
    params = init_params(k_p, in_ft, out_ft)

    out = jax.block_until_ready(proj_head(x, params))
    ref = _reference(x, params)
    assert out.shape == (N, out_ft)
    assert jnp.allclose(out, ref, atol=2e-2, rtol=2e-2), "mismatch vs reference (test 1)"

    # Test 2: non-divisible row count -> exercises row tiling + masked partial
    # last block, and the >=2-grid-step clamp.
    N2, in_ft2, out_ft2 = 300, 64, 32
    x2 = jax.random.normal(k_x2, (N2, in_ft2), jnp.float32)
    params2 = init_params(k_p2, in_ft2, out_ft2)

    out2 = jax.block_until_ready(proj_head(x2, params2))
    ref2 = _reference(x2, params2)
    assert out2.shape == (N2, out_ft2)
    assert jnp.allclose(out2, ref2, atol=2e-2, rtol=2e-2), "mismatch vs reference (test 2)"

    print("KERNEL_OK")
</pallas_src>

<mosaic_0001>
module attributes {stable_mosaic.version = 11 : i64} {
  func.func @proj_head_kernel(%arg0: i32, %arg1: memref<3xf32, #tpu.memory_space<smem>>, %arg2: memref<8x32xf32, #tpu.memory_space<vmem>>, %arg3: memref<32x256xbf16, #tpu.memory_space<vmem>>, %arg4: memref<1x256xf32, #tpu.memory_space<vmem>>, %arg5: memref<128x128xbf16, #tpu.memory_space<vmem>>, %arg6: memref<1x128xf32, #tpu.memory_space<vmem>>, %arg7: memref<128x128xbf16, #tpu.memory_space<vmem>>, %arg8: memref<1x128xf32, #tpu.memory_space<vmem>>, %arg9: memref<8x32xf32, #tpu.memory_space<vmem>>) attributes {dimension_semantics = [#tpu.dimension_semantics<parallel>], iteration_bounds = array<i64: 1>, scalar_prefetch = 0 : i64, scratch_operands = 0 : i64, tpu.core_type = #tpu.core_type<tc>, window_params = [{transform_indices = @transform_0, window_bounds = array<i64: 3>}, {transform_indices = @transform_1, window_bounds = array<i64: 8, 32>}, {pipeline_mode = #tpu.pipeline_mode<synchronous>, transform_indices = @transform_2, window_bounds = array<i64: 32, 256>}, {pipeline_mode = #tpu.pipeline_mode<synchronous>, transform_indices = @transform_3, window_bounds = array<i64: 1, 256>}, {pipeline_mode = #tpu.pipeline_mode<synchronous>, transform_indices = @transform_4, window_bounds = array<i64: 128, 128>}, {pipeline_mode = #tpu.pipeline_mode<synchronous>, transform_indices = @transform_5, window_bounds = array<i64: 1, 128>}, {pipeline_mode = #tpu.pipeline_mode<synchronous>, transform_indices = @transform_6, window_bounds = array<i64: 128, 128>}, {pipeline_mode = #tpu.pipeline_mode<synchronous>, transform_indices = @transform_7, window_bounds = array<i64: 1, 128>}, {transform_indices = @transform_8, window_bounds = array<i64: 8, 32>}]} {
    %c0 = arith.constant 0 : index
    %0 = memref.load %arg1[%c0] : memref<3xf32, #tpu.memory_space<smem>>
    %c1 = arith.constant 1 : index
    %1 = memref.load %arg1[%c1] : memref<3xf32, #tpu.memory_space<smem>>
    %c2 = arith.constant 2 : index
    %2 = memref.load %arg1[%c2] : memref<3xf32, #tpu.memory_space<smem>>
    %c0_0 = arith.constant 0 : index
    %c0_1 = arith.constant 0 : index
    %3 = vector.load %arg2[%c0_0, %c0_1] : memref<8x32xf32, #tpu.memory_space<vmem>>, vector<8x32xf32>
    %4 = arith.truncf %3 : vector<8x32xf32> to vector<8x32xbf16>
    %c0_2 = arith.constant 0 : index
    %c0_3 = arith.constant 0 : index
    %5 = vector.load %arg3[%c0_2, %c0_3] : memref<32x256xbf16, #tpu.memory_space<vmem>>, vector<32x256xbf16>
    %cst = arith.constant dense<0.000000e+00> : vector<8x256xf32>
    %6 = tpu.matmul %4, %5, %cst {dimension_numbers = #tpu.dot_dimension_numbers<[1], [0], [0], [1], [0, 0, 1, 1], [], []>} : vector<8x32xbf16>, vector<32x256xbf16>, vector<8x256xf32> -> vector<8x256xf32>
    %c0_4 = arith.constant 0 : index
    %c0_5 = arith.constant 0 : index
    %7 = vector.load %arg4[%c0_4, %c0_5] : memref<1x256xf32, #tpu.memory_space<vmem>>, vector<1x256xf32>
    %8 = vector.broadcast %7 : vector<1x256xf32> to vector<8x256xf32>
    %9 = arith.addf %6, %8 : vector<8x256xf32>
    %10 = vector.extract_strided_slice %9 {offsets = [0, 0], sizes = [8, 128], strides = [1, 1]} : vector<8x256xf32> to vector<8x128xf32>
    %11 = vector.extract_strided_slice %9 {offsets = [0, 128], sizes = [8, 128], strides = [1, 1]} : vector<8x256xf32> to vector<8x128xf32>
    %cst_6 = arith.constant 0.000000e+00 : f32
    %12 = vector.broadcast %cst_6 : f32 to vector<8x128xf32>
    %13 = arith.cmpf oge, %10, %12 : vector<8x128xf32>
    %14 = vector.broadcast %0 : f32 to vector<8x128xf32>
    %15 = arith.mulf %14, %10 : vector<8x128xf32>
    %16 = arith.select %13, %10, %15 : vector<8x128xi1>, vector<8x128xf32>
    %17 = arith.truncf %16 : vector<8x128xf32> to vector<8x128xbf16>
    %c0_7 = arith.constant 0 : index
    %c0_8 = arith.constant 0 : index
    %18 = vector.load %arg5[%c0_7, %c0_8] : memref<128x128xbf16, #tpu.memory_space<vmem>>, vector<128x128xbf16>
    %cst_9 = arith.constant dense<0.000000e+00> : vector<8x128xf32>
    %19 = tpu.matmul %17, %18, %cst_9 {dimension_numbers = #tpu.dot_dimension_numbers<[1], [0], [0], [1], [0, 0, 1, 1], [], []>} : vector<8x128xbf16>, vector<128x128xbf16>, vector<8x128xf32> -> vector<8x128xf32>
    %c0_10 = arith.constant 0 : index
    %c0_11 = arith.constant 0 : index
    %20 = vector.load %arg6[%c0_10, %c0_11] : memref<1x128xf32, #tpu.memory_space<vmem>>, vector<1x128xf32>
    %21 = vector.broadcast %20 : vector<1x128xf32> to vector<8x128xf32>
    %22 = arith.addf %19, %21 : vector<8x128xf32>
    %cst_12 = arith.constant 0.000000e+00 : f32
    %23 = vector.broadcast %cst_12 : f32 to vector<8x128xf32>
    %24 = arith.cmpf oge, %22, %23 : vector<8x128xf32>
    %25 = vector.broadcast %1 : f32 to vector<8x128xf32>
    %26 = arith.mulf %25, %22 : vector<8x128xf32>
    %27 = arith.select %24, %22, %26 : vector<8x128xi1>, vector<8x128xf32>
    %28 = arith.truncf %27 : vector<8x128xf32> to vector<8x128xbf16>
    %c0_13 = arith.constant 0 : index
    %c0_14 = arith.constant 0 : index
    %29 = vector.load %arg7[%c0_13, %c0_14] : memref<128x128xbf16, #tpu.memory_space<vmem>>, vector<128x128xbf16>
    %cst_15 = arith.constant dense<0.000000e+00> : vector<8x128xf32>
    %30 = tpu.matmul %28, %29, %cst_15 {dimension_numbers = #tpu.dot_dimension_numbers<[1], [0], [0], [1], [0, 0, 1, 1], [], []>} : vector<8x128xbf16>, vector<128x128xbf16>, vector<8x128xf32> -> vector<8x128xf32>
    %c0_16 = arith.constant 0 : index
    %c0_17 = arith.constant 0 : index
    %31 = vector.load %arg8[%c0_16, %c0_17] : memref<1x128xf32, #tpu.memory_space<vmem>>, vector<1x128xf32>
    %32 = vector.broadcast %31 : vector<1x128xf32> to vector<8x128xf32>
    %33 = arith.addf %30, %32 : vector<8x128xf32>
    %cst_18 = arith.constant 0.000000e+00 : f32
    %34 = vector.broadcast %cst_18 : f32 to vector<8x128xf32>
    %35 = arith.cmpf oge, %33, %34 : vector<8x128xf32>
    %36 = vector.broadcast %2 : f32 to vector<8x128xf32>
    %37 = arith.mulf %36, %33 : vector<8x128xf32>
    %38 = arith.select %35, %33, %37 : vector<8x128xi1>, vector<8x128xf32>
    %39 = arith.addf %38, %11 : vector<8x128xf32>
    %40 = vector.extract_strided_slice %39 {offsets = [0, 0], sizes = [8, 32], strides = [1, 1]} : vector<8x128xf32> to vector<8x32xf32>
    %c0_19 = arith.constant 0 : index
    %c0_20 = arith.constant 0 : index
    %41 = vector.load %arg9[%c0_19, %c0_20] : memref<8x32xf32, #tpu.memory_space<vmem>>, vector<8x32xf32>
    tpu.vector_store %arg9[%c0_19, %c0_20], %40 {strides = array<i32>} : memref<8x32xf32, #tpu.memory_space<vmem>>, vector<8x32xf32>,
    return
  }
  func.func @transform_0(%arg0: i32) -> i32 {
    %c0_i32 = arith.constant 0 : i32
    %c0_i32_0 = arith.constant 0 : i32
    return %c0_i32 : i32
  }
  func.func @transform_1(%arg0: i32) -> (i32, i32) {
    %c0_i32 = arith.constant 0 : i32
    %c0_i32_0 = arith.constant 0 : i32
    return %arg0, %c0_i32 : i32, i32
  }
  func.func @transform_2(%arg0: i32) -> (i32, i32) {
    %c0_i32 = arith.constant 0 : i32
    %c0_i32_0 = arith.constant 0 : i32
    %c0_i32_1 = arith.constant 0 : i32
    return %c0_i32, %c0_i32_0 : i32, i32
  }
  func.func @transform_3(%arg0: i32) -> (i32, i32) {
    %c0_i32 = arith.constant 0 : i32
    %c0_i32_0 = arith.constant 0 : i32
    %c0_i32_1 = arith.constant 0 : i32
    return %c0_i32, %c0_i32_0 : i32, i32
  }
  func.func @transform_4(%arg0: i32) -> (i32, i32) {
    %c0_i32 = arith.constant 0 : i32
    %c0_i32_0 = arith.constant 0 : i32
    %c0_i32_1 = arith.constant 0 : i32
    return %c0_i32, %c0_i32_0 : i32, i32
  }
  func.func @transform_5(%arg0: i32) -> (i32, i32) {
    %c0_i32 = arith.constant 0 : i32
    %c0_i32_0 = arith.constant 0 : i32
    %c0_i32_1 = arith.constant 0 : i32
    return %c0_i32, %c0_i32_0 : i32, i32
  }
  func.func @transform_6(%arg0: i32) -> (i32, i32) {
    %c0_i32 = arith.constant 0 : i32
    %c0_i32_0 = arith.constant 0 : i32
    %c0_i32_1 = arith.constant 0 : i32
    return %c0_i32, %c0_i32_0 : i32, i32
  }
  func.func @transform_7(%arg0: i32) -> (i32, i32) {
    %c0_i32 = arith.constant 0 : i32
    %c0_i32_0 = arith.constant 0 : i32
    %c0_i32_1 = arith.constant 0 : i32
    return %c0_i32, %c0_i32_0 : i32, i32
  }
  func.func @transform_8(%arg0: i32) -> (i32, i32) {
    %c0_i32 = arith.constant 0 : i32
    %c0_i32_0 = arith.constant 0 : i32
    return %arg0, %c0_i32 : i32, i32
  }
}

</mosaic_0001>

<llo_original>
// kernel: tpu_custom_call.1
$region0: #{tpu_custom_call.1}
  #allocation0 [shape = 'u32[]', space=smem, size = 0x4, offset = 0x4, fixed_abs, tag = 'smem constant byte address 0x4 - core index']
  #allocation1 [shape = 'u32[72,128]{1,0:T(1,128)}', space=vmem, size = 0x9000, scoped, tag = 'internal scratch']
  %s0 = inlined_call_operand.hbm [shape: f32[3], index: 0, kind: input, shape index: {}]
  %s1 = inlined_call_operand.hbm [shape: f32[8,32], index: 1, kind: input, shape index: {}]
  %s2 = inlined_call_operand.hbm [shape: bf16[32,256], index: 2, kind: input, shape index: {}]
  %s3 = inlined_call_operand.vmem [shape: f32[1,256], index: 3, kind: input, shape index: {}]
  %s4 = inlined_call_operand.hbm [shape: bf16[128,128], index: 4, kind: input, shape index: {}]
  %s5 = inlined_call_operand.vmem [shape: f32[1,128], index: 5, kind: input, shape index: {}]
  %s6 = inlined_call_operand.hbm [shape: bf16[128,128], index: 6, kind: input, shape index: {}]
  %s7 = inlined_call_operand.vmem [shape: f32[1,128], index: 7, kind: input, shape index: {}]
  %s8 = inlined_call_operand.hbm [shape: f32[8,32], index: 8, kind: output, shape index: {}]
  %s9 = sld [smem:[#allocation0]]
  $region62: #{tpu_custom_call.1} parent=0
    _
  %s11 = ssub.s32 1, %s9
  %s12 = scalar_select 0, %s11, %s9
  $region1: #{tpu_custom_call.1} parent=0
    #allocation2 [shape = 'u8[512]{0}', space=smem, size = 0x200, scoped, tag = 'input window, operand 0, single buffered']
    #allocation3 [shape = 's32[1]{0}', space=sflag, size = 0x4, scoped, tag = 'scoped memory for tpu_custom_call.1']
    #allocation4 [shape = 's32[1]{0}', space=sflag, size = 0x4, scoped, tag = 'scoped memory for tpu_custom_call.1']
    #allocation5 [shape = 's32[1]{0}', space=sflag, size = 0x4, scoped, tag = 'scoped memory for tpu_custom_call.1']
    #allocation6 [shape = 'u8[4096]{0}', space=vmem, size = 0x1000, scoped, tag = 'input window, operand 1, single buffered']
    #allocation7 [shape = 'u8[16384]{0}', space=vmem, size = 0x4000, scoped, tag = 'input window, operand 2, single buffered']
    #allocation8 [shape = 's32[1]{0}', space=sflag, size = 0x4, scoped, tag = 'scoped memory for tpu_custom_call.1']
    #allocation9 [shape = 'u8[32768]{0}', space=vmem, size = 0x8000, scoped, tag = 'input window, operand 4, single buffered']
    #allocation10 [shape = 'u8[32768]{0}', space=vmem, size = 0x8000, scoped, tag = 'input window, operand 6, single buffered']
    #allocation11 [shape = 's32[1]{0}', space=sflag, size = 0x4, scoped, tag = 'scoped memory for tpu_custom_call.1']
    #allocation12 [shape = 'u8[4096]{0}', space=vmem, size = 0x1000, scoped, tag = 'output window, operand 0, single buffered']
    %13 = vsyncpa [#allocation5], 0
    %14 = vsyncpa [#allocation3], 0
    %15 = vsyncpa [#allocation8], 0
    %16 = vsyncpa [#allocation11], 0
    %17 = vsyncpa [#allocation4], 0
    // Predicated region
    $region2: #{tpu_custom_call.1} parent=1 // pred_check
      _
    $region3: #{tpu_custom_call.1} parent=1 // pred_check_branch
      %19 = sbr.rel (0) target = $region5
    $region4: #{tpu_custom_call.1} parent=1 // pred_region
      %21 = vsyncadd [#allocation5], 0
      %s23 = sshll.u32 %s0, 4
      %s24 = int_to_ptr.hbm [resolvable:$true] %s23
      %26 = dma.hbm_to_smem %s24, 16, [#allocation2], [#allocation5]
    $region5: #{tpu_custom_call.1} parent=1 // pred_fallthru
      _
    // Predicated region
    $region6: #{tpu_custom_call.1} parent=1 // pred_check
      _
    $region7: #{tpu_custom_call.1} parent=1 // pred_check_branch
      %28 = sbr.rel (0) target = $region9
    $region8: #{tpu_custom_call.1} parent=1 // pred_region
      %30 = vsyncadd [#allocation3], 0
      %s32 = sshll.u32 %s1, 4
      %s33 = int_to_ptr.hbm [resolvable:$true] %s32
      %s34 = sshll.u32 [#allocation6], 4
      %s35 = int_to_ptr.vmem [resolvable:$true] %s34
      %37 = dma.hbm_to_vmem [thread:$0]  %s33, 128, %s35, [#allocation3]
    $region9: #{tpu_custom_call.1} parent=1 // pred_fallthru
      _
    // Predicated region
    $region10: #{tpu_custom_call.1} parent=1 // pred_check
      _
    $region11: #{tpu_custom_call.1} parent=1 // pred_check_branch
      %39 = sbr.rel (0) target = $region13
    $region12: #{tpu_custom_call.1} parent=1 // pred_region
      %41 = vsyncadd [#allocation8], 0
      %s42 = sshll.u32 %s2, 4
      %s43 = int_to_ptr.hbm [resolvable:$true] %s42
      %s44 = sshll.u32 [#allocation7], 4
      %s45 = int_to_ptr.vmem [resolvable:$true] %s44
      %50 = dma.hbm_to_vmem [thread:$0]  %s43, 512, %s45, [#allocation8], 128, 128, 8
    $region13: #{tpu_custom_call.1} parent=1 // pred_fallthru
      _
    // Predicated region
    $region14: #{tpu_custom_call.1} parent=1 // pred_check
      _
    $region15: #{tpu_custom_call.1} parent=1 // pred_check_branch
      %52 = sbr.rel (0) target = $region17
    $region16: #{tpu_custom_call.1} parent=1 // pred_region
      _
    $region17: #{tpu_custom_call.1} parent=1 // pred_fallthru
      _
    // Predicated region
    $region18: #{tpu_custom_call.1} parent=1 // pred_check
      _
    $region19: #{tpu_custom_call.1} parent=1 // pred_check_branch
      %54 = sbr.rel (0) target = $region21
    $region20: #{tpu_custom_call.1} parent=1 // pred_region
      %56 = vsyncadd [#allocation8], 0
      %s57 = sshll.u32 %s4, 4
      %s58 = int_to_ptr.hbm [resolvable:$true] %s57
      %s59 = sshll.u32 [#allocation9], 4
      %s60 = int_to_ptr.vmem [resolvable:$true] %s59
      %65 = dma.hbm_to_vmem [thread:$0]  %s58, 1024, %s60, [#allocation8], 64, 64, 4
    $region21: #{tpu_custom_call.1} parent=1 // pred_fallthru
      _
    // Predicated region
    $region22: #{tpu_custom_call.1} parent=1 // pred_check
      _
    $region23: #{tpu_custom_call.1} parent=1 // pred_check_branch
      %67 = sbr.rel (0) target = $region25
    $region24: #{tpu_custom_call.1} parent=1 // pred_region
      _
    $region25: #{tpu_custom_call.1} parent=1 // pred_fallthru
      _
    // Predicated region
    $region26: #{tpu_custom_call.1} parent=1 // pred_check
      _
    $region27: #{tpu_custom_call.1} parent=1 // pred_check_branch
      %69 = sbr.rel (0) target = $region29
    $region28: #{tpu_custom_call.1} parent=1 // pred_region
      %71 = vsyncadd [#allocation11], 0
      %s72 = sshll.u32 %s6, 4
      %s73 = int_to_ptr.hbm [resolvable:$true] %s72
      %s74 = sshll.u32 [#allocation10], 4
      %s75 = int_to_ptr.vmem [resolvable:$true] %s74
      %80 = dma.hbm_to_vmem [thread:$0]  %s73, 1024, %s75, [#allocation11], 64, 64, 4
    $region29: #{tpu_custom_call.1} parent=1 // pred_fallthru
      _
    // Predicated region
    $region30: #{tpu_custom_call.1} parent=1 // pred_check
      _
    $region31: #{tpu_custom_call.1} parent=1 // pred_check_branch
      %82 = sbr.rel (0) target = $region33
    $region32: #{tpu_custom_call.1} parent=1 // pred_region
      _
    $region33: #{tpu_custom_call.1} parent=1 // pred_fallthru
      _
    // Predicated region
    $region34: #{tpu_custom_call.1} parent=1 // pred_check
      _
    $region35: #{tpu_custom_call.1} parent=1 // pred_check_branch
      %84 = sbr.rel (0) target = $region37
    $region36: #{tpu_custom_call.1} parent=1 // pred_region
      %86 = dma.done [#allocation5], 16
    $region37: #{tpu_custom_call.1} parent=1 // pred_fallthru
      _
    // Predicated region
    $region38: #{tpu_custom_call.1} parent=1 // pred_check
      _
    $region39: #{tpu_custom_call.1} parent=1 // pred_check_branch
      %88 = sbr.rel (0) target = $region41
    $region40: #{tpu_custom_call.1} parent=1 // pred_region
      %90 = dma.done [#allocation3], 128
    $region41: #{tpu_custom_call.1} parent=1 // pred_fallthru
      _
    // Predicated region
    $region42: #{tpu_custom_call.1} parent=1 // pred_check
      _
    $region43: #{tpu_custom_call.1} parent=1 // pred_check_branch
      %92 = sbr.rel (0) target = $region45
    $region44: #{tpu_custom_call.1} parent=1 // pred_region
      %94 = dma.done [#allocation8], 512
    $region45: #{tpu_custom_call.1} parent=1 // pred_fallthru
      _
    // Predicated region
    $region46: #{tpu_custom_call.1} parent=1 // pred_check
      _
    $region47: #{tpu_custom_call.1} parent=1 // pred_check_branch
      %96 = sbr.rel (0) target = $region49
    $region48: #{tpu_custom_call.1} parent=1 // pred_region
      %98 = dma.done [#allocation8], 1024
    $region49: #{tpu_custom_call.1} parent=1 // pred_fallthru
      _
    // Predicated region
    $region50: #{tpu_custom_call.1} parent=1 // pred_check
      _
    $region51: #{tpu_custom_call.1} parent=1 // pred_check_branch
      %100 = sbr.rel (0) target = $region53
    $region52: #{tpu_custom_call.1} parent=1 // pred_region
      %102 = dma.done [#allocation11], 1024
    $region53: #{tpu_custom_call.1} parent=1 // pred_fallthru
      _
    %103 = sfence
    %s105 = sld [smem:[#allocation2]]
    %s106 = sld [smem:[#allocation2 + $0x1]]
    %s107 = sld [smem:[#allocation2 + $0x2]]
    %v108 = vld [vmem:[#allocation6] sm:$0xff]
    %v109 = vpack.c.bf16 %v108, %v108
    %v110 = vld [vmem:[#allocation7] sm:$0xff]
    %v111 = vld [vmem:[#allocation7 + $0x8] sm:$0xff]
    %v112 = vld [vmem:[#allocation7 + $0x10] sm:$0xff]
    %v113 = vld [vmem:[#allocation7 + $0x18] sm:$0xff]
    %v114 = vld [vmem:[%s3] sm:$0x3]
    %v116 = vperm.slane %v114, 0
    %v117 = vperm.slane %v114, 1
    %v124 = vunpack.c.l.b16 %v110
    %v125 = vunpack.c.h.b16 %v110
    %v126 = vunpack.c.l.b16 %v111
    %v127 = vunpack.c.h.b16 %v111
    %v128 = vunpack.c.l.b16 %v112
    %v129 = vunpack.c.h.b16 %v112
    %v130 = vunpack.c.l.b16 %v113
    %v131 = vunpack.c.h.b16 %v113
    %v132 = vpack.c.b16 %v126, %v124
    %v133 = vpack.c.b16 %v127, %v125
    %v134 = vpack.c.b16 %v130, %v128
    %v135 = vpack.c.b16 %v131, %v129
    %vm140 = vcmask 261120
    %v142 = vsel %vm140, %v109, 0
    %144 = vmatpush.bf16.msra.mxu0 0
    %145 = vmatpush.bf16.msra.mxu0 0
    %146 = vmatpush.bf16.msra.mxu0 0
    %147 = vmatpush.bf16.msra.mxu0 0
    %148 = vmatpush.bf16.msra.mxu0 0
    %149 = vmatpush.bf16.msra.mxu0 0
    %150 = vmatpush.bf16.msra.mxu0 %v134
    %151 = vmatpush.bf16.msra.mxu0 %v132
    %152 = vmatmul.bf16.gmra.mxu0 %v142
    %v153 = vpop.f32.mrf.mxu0
    %v154 = vadd.f32 %v116, %v153
    %v155 = vpop.f32.mrf.mxu0
    %156 = vdwg.mxu0
    %157 = vmatpush.bf16.msra.mxu0 0
    %158 = vmatpush.bf16.msra.mxu0 0
    %159 = vmatpush.bf16.msra.mxu0 0
    %160 = vmatpush.bf16.msra.mxu0 0
    %161 = vmatpush.bf16.msra.mxu0 0
    %162 = vmatpush.bf16.msra.mxu0 0
    %163 = vmatpush.bf16.msra.mxu0 %v135
    %164 = vmatpush.bf16.msra.mxu0 %v133
    %165 = vmatmul.bf16.gmra.mxu0 %v142
    %v166 = vpop.f32.mrf.mxu0
    %v167 = vadd.f32 %v117, %v166
    %v168 = vpop.f32.mrf.mxu0
    %169 = vdwg.mxu0
    %vm170 = vcmp.ge.f32.partialorder %v154, 0.0
    %v171 = vstv %s105
    %v172 = vmul.f32 %v171, %v154
    %v173 = vsel %vm170, %v154, %v172
    %v174 = vpack.c.bf16 %v173, %v173
    %v175 = vld [vmem:[#allocation9] sm:$0xf]
    %v176 = vld [vmem:[#allocation9 + $0x4] sm:$0xf]
    %v177 = vld [vmem:[#allocation9 + $0x8] sm:$0xf]
    %v178 = vld [vmem:[#allocation9 + $0xc] sm:$0xf]
    %v179 = vld [vmem:[#allocation9 + $0x10] sm:$0xf]
    %v180 = vld [vmem:[#allocation9 + $0x14] sm:$0xf]
    %v181 = vld [vmem:[#allocation9 + $0x18] sm:$0xf]
    %v182 = vld [vmem:[#allocation9 + $0x1c] sm:$0xf]
    %v183 = vld [vmem:[#allocation9 + $0x20] sm:$0xf]
    %v184 = vld [vmem:[#allocation9 + $0x24] sm:$0xf]
    %v185 = vld [vmem:[#allocation9 + $0x28] sm:$0xf]
    %v186 = vld [vmem:[#allocation9 + $0x2c] sm:$0xf]
    %v187 = vld [vmem:[#allocation9 + $0x30] sm:$0xf]
    %v188 = vld [vmem:[#allocation9 + $0x34] sm:$0xf]
    %v189 = vld [vmem:[#allocation9 + $0x38] sm:$0xf]
    %v190 = vld [vmem:[#allocation9 + $0x3c] sm:$0xf]
    %v191 = vld [vmem:[%s5] sm:$0x1]
    %v193 = vperm.slane %v191, 0
    %v211 = vunpack.c.l.b16 %v175
    %v212 = vunpack.c.l.b16 %v176
    %v213 = vunpack.c.l.b16 %v177
    %v214 = vunpack.c.l.b16 %v178
    %v215 = vunpack.c.l.b16 %v179
    %v216 = vunpack.c.l.b16 %v180
    %v217 = vunpack.c.l.b16 %v181
    %v218 = vunpack.c.l.b16 %v182
    %v219 = vunpack.c.l.b16 %v183
    %v220 = vunpack.c.l.b16 %v184
    %v221 = vunpack.c.l.b16 %v185
    %v222 = vunpack.c.l.b16 %v186
    %v223 = vunpack.c.l.b16 %v187
    %v224 = vunpack.c.l.b16 %v188
    %v225 = vunpack.c.l.b16 %v189
    %v226 = vunpack.c.l.b16 %v190
    %v227 = vpack.c.b16 %v212, %v211
    %v228 = vpack.c.b16 %v214, %v213
    %v229 = vpack.c.b16 %v216, %v215
    %v230 = vpack.c.b16 %v218, %v217
    %v231 = vpack.c.b16 %v220, %v219
    %v232 = vpack.c.b16 %v222, %v221
    %v233 = vpack.c.b16 %v224, %v223
    %v234 = vpack.c.b16 %v226, %v225
    %243 = vmatpush.bf16.msra.mxu0 %v234
    %244 = vmatpush.bf16.msra.mxu0 %v233
    %245 = vmatpush.bf16.msra.mxu0 %v232
    %246 = vmatpush.bf16.msra.mxu0 %v231
    %247 = vmatpush.bf16.msra.mxu0 %v230
    %248 = vmatpush.bf16.msra.mxu0 %v229
    %249 = vmatpush.bf16.msra.mxu0 %v228
    %250 = vmatpush.bf16.msra.mxu0 %v227
    %251 = vmatmul.bf16.gmra.mxu0 %v174
    %v252 = vpop.f32.mrf.mxu0
    %v253 = vadd.f32 %v193, %v252
    %v254 = vpop.f32.mrf.mxu0
    %255 = vdwg.mxu0
    %vm256 = vcmp.ge.f32.partialorder %v253, 0.0
    %v257 = vstv %s106
    %v258 = vmul.f32 %v257, %v253
    %v259 = vsel %vm256, %v253, %v258
    %v260 = vpack.c.bf16 %v259, %v259
    %v261 = vld [vmem:[#allocation10] sm:$0xf]
    %v262 = vld [vmem:[#allocation10 + $0x4] sm:$0xf]
    %v263 = vld [vmem:[#allocation10 + $0x8] sm:$0xf]
    %v264 = vld [vmem:[#allocation10 + $0xc] sm:$0xf]
    %v265 = vld [vmem:[#allocation10 + $0x10] sm:$0xf]
    %v266 = vld [vmem:[#allocation10 + $0x14] sm:$0xf]
    %v267 = vld [vmem:[#allocation10 + $0x18] sm:$0xf]
    %v268 = vld [vmem:[#allocation10 + $0x1c] sm:$0xf]
    %v269 = vld [vmem:[#allocation10 + $0x20] sm:$0xf]
    %v270 = vld [vmem:[#allocation10 + $0x24] sm:$0xf]
    %v271 = vld [vmem:[#allocation10 + $0x28] sm:$0xf]
    %v272 = vld [vmem:[#allocation10 + $0x2c] sm:$0xf]
    %v273 = vld [vmem:[#allocation10 + $0x30] sm:$0xf]
    %v274 = vld [vmem:[#allocation10 + $0x34] sm:$0xf]
    %v275 = vld [vmem:[#allocation10 + $0x38] sm:$0xf]
    %v276 = vld [vmem:[#allocation10 + $0x3c] sm:$0xf]
    %v277 = vld [vmem:[%s7] sm:$0x1]
    %v279 = vperm.slane %v277, 0
    %v297 = vunpack.c.l.b16 %v261
    %v298 = vunpack.c.l.b16 %v262
    %v299 = vunpack.c.l.b16 %v263
    %v300 = vunpack.c.l.b16 %v264
    %v301 = vunpack.c.l.b16 %v265
    %v302 = vunpack.c.l.b16 %v266
    %v303 = vunpack.c.l.b16 %v267
    %v304 = vunpack.c.l.b16 %v268
    %v305 = vunpack.c.l.b16 %v269
    %v306 = vunpack.c.l.b16 %v270
    %v307 = vunpack.c.l.b16 %v271
    %v308 = vunpack.c.l.b16 %v272
    %v309 = vunpack.c.l.b16 %v273
    %v310 = vunpack.c.l.b16 %v274
    %v311 = vunpack.c.l.b16 %v275
    %v312 = vunpack.c.l.b16 %v276
    %v313 = vpack.c.b16 %v298, %v297
    %v314 = vpack.c.b16 %v300, %v299
    %v315 = vpack.c.b16 %v302, %v301
    %v316 = vpack.c.b16 %v304, %v303
    %v317 = vpack.c.b16 %v306, %v305
    %v318 = vpack.c.b16 %v308, %v307
    %v319 = vpack.c.b16 %v310, %v309
    %v320 = vpack.c.b16 %v312, %v311
    %329 = vmatpush.bf16.msra.mxu0 %v320
    %330 = vmatpush.bf16.msra.mxu0 %v319
    %331 = vmatpush.bf16.msra.mxu0 %v318
    %332 = vmatpush.bf16.msra.mxu0 %v317
    %333 = vmatpush.bf16.msra.mxu0 %v316
    %334 = vmatpush.bf16.msra.mxu0 %v315
    %335 = vmatpush.bf16.msra.mxu0 %v314
    %336 = vmatpush.bf16.msra.mxu0 %v313
    %337 = vmatmul.bf16.gmra.mxu0 %v260
    %v338 = vpop.f32.mrf.mxu0
    %v339 = vadd.f32 %v279, %v338
    %v340 = vpop.f32.mrf.mxu0
    %341 = vdwg.mxu0
    %vm342 = vcmp.ge.f32.partialorder %v339, 0.0
    %v343 = vstv %s107
    %v344 = vmul.f32 %v343, %v339
    %v345 = vsel %vm342, %v339, %v344
    %v346 = vadd.f32 %v345, %v167
    %347 = vst.msk [vmem:[#allocation12] sm:$0xff] %vm140, %v346
    // Predicated region
    $region54: #{tpu_custom_call.1} parent=1 // pred_check
      _
    $region55: #{tpu_custom_call.1} parent=1 // pred_check_branch
      %349 = sbr.rel (0) target = $region57
    $region56: #{tpu_custom_call.1} parent=1 // pred_region
      %351 = vsyncadd [#allocation4], 0
      %s353 = sshll.u32 [#allocation12], 4
      %s354 = int_to_ptr.vmem [resolvable:$true] %s353
      %s355 = sshll.u32 %s8, 4
      %s356 = int_to_ptr.hbm [resolvable:$true] %s355
      %358 = dma.vmem_to_hbm [thread:$0]  %s354, 128, %s356, [#allocation4]
    $region57: #{tpu_custom_call.1} parent=1 // pred_fallthru
      _
    // Predicated region
    $region58: #{tpu_custom_call.1} parent=1 // pred_check
      _
    $region59: #{tpu_custom_call.1} parent=1 // pred_check_branch
      %360 = sbr.rel (0) target = $region61
    $region60: #{tpu_custom_call.1} parent=1 // pred_region
      %362 = dma.done [#allocation4], 128
    $region61: #{tpu_custom_call.1} parent=1 // pred_fallthru
      _
    %363 = vsyncpa [#allocation3], 1
    %364 = vsyncpa [#allocation8], 1
    %365 = vsyncpa [#allocation11], 1
    %366 = vsyncpa [#allocation4], 1
    %367 = vsyncpa [#allocation5], 1

</llo_original>
